<compile_context>
chip_gen: v5e
topology: v5e:2x2
jax: 0.10.0
libtpu: 0.0.40
codegen_flags: <defaults>
</compile_context>

<pallas_src>
import functools

import jax
import jax.numpy as jnp
from jax.experimental import pallas as pl
from jax.experimental.pallas import tpu as pltpu


def _round_up(x, m):
    return (x + m - 1) // m * m


def _vmem_capacity_bytes():
    # Per-generation VMEM capacity; fall back to the smallest (v7x, 64 MiB).
    try:
        return int(pltpu.get_tpu_info().vmem_capacity_bytes)
    except Exception:
        return 64 * 2**20


def prepare_linear_weight(linear_w):
    """One-time weight prep, hoisted out of the per-step path.

    PyTorch nn.Linear weight (V, E) -> (E, V) bf16: lane-dense in V and in the
    canonical MXU (M,K)@(K,N) orientation, so no per-tile transpose is needed
    and no per-call cast/pad copies of W hit HBM.
    """
    return jnp.asarray(linear_w).T.astype(jnp.bfloat16)


def _make_skipgram_kernel(v_actual, tv):
    need_mask = (v_actual % tv) != 0  # only the ragged last vocab tile

    def kernel(emb_ref, w_ref, out_ref, m_sc, l_sc):
        p = pl.program_id(1)   # sweep: 0 = LSE accumulation, 1 = write log-probs
        j = pl.program_id(2)   # vocab tile index (innermost, "arbitrary")
        nv = pl.num_programs(2)

        @pl.when(jnp.logical_and(p == 0, j == 0))
        def _init():
            m_sc[...] = jnp.full_like(m_sc[...], -jnp.inf)
            l_sc[...] = jnp.zeros_like(l_sc[...])

        # (tb, E) @ (E, tv) on the MXU, f32 accumulation, lane-dense in tv.
        # Recomputed on both sweeps (extra W read is far cheaper than the f32
        # logits HBM round-trip it replaces).
        logits = jnp.dot(emb_ref[...], w_ref[...],
                         preferred_element_type=jnp.float32)

        @pl.when(p == 0)
        def _accumulate():
            lg = logits
            if need_mask:
                # Columns past V on the ragged last tile are undefined; mask
                # them out of the log-sum-exp.  (Interior tiles see an
                # all-true mask; cost is a few VPU passes, negligible vs the
                # HBM-bound writeback.)
                col = j * tv + jax.lax.broadcasted_iota(jnp.int32, lg.shape, 1)
                lg = jnp.where(col < v_actual, lg, -jnp.inf)
            m_prev = m_sc[...]
            m_new = jnp.maximum(m_prev, jnp.max(lg, axis=-1, keepdims=True))
            l_sc[...] = (l_sc[...] * jnp.exp(m_prev - m_new)
                         + jnp.sum(jnp.exp(lg - m_new), axis=-1, keepdims=True))
            m_sc[...] = m_new

        @pl.when(jnp.logical_and(p == 0, j == nv - 1))
        def _finalize_lse():
            # Reuse m_sc to hold the per-row logsumexp for the write sweep.
            m_sc[...] = m_sc[...] + jnp.log(l_sc[...])

        @pl.when(p == 1)
        def _write():
            # Direct log-softmax output; OOB rows/columns of ragged edge
            # blocks are discarded by Pallas on writeback.
            out_ref[...] = logits - m_sc[...]

    return kernel


@functools.partial(jax.jit, static_argnames=("tb", "tv", "num_tensorcores"))
def skipgram_forward(inputs, emb_table, linear_w_t, *, tb=512, tv=2048,
                     num_tensorcores=1):
    """inputs: (B,) int32 ids; emb_table: (V, E) f32;
    linear_w_t: (E, V) prepared weight (see prepare_linear_weight)."""
    B = inputs.shape[0]
    E = emb_table.shape[1]
    if linear_w_t.ndim != 2 or linear_w_t.shape[0] != E:
        raise ValueError("linear_w_t must be (E, V); use prepare_linear_weight "
                         "on the PyTorch (V, E) nn.Linear weight.")
    V = linear_w_t.shape[1]

    # Clamp tiles to the problem (multiples of 8 / 128); ragged edge blocks are
    # handled in-kernel, so no padded HBM copies of W or embeds are made.
    tb = max(8, min(tb, _round_up(B, 8)))
    if num_tensorcores > 1:
        # Give the "parallel" batch axis >= 1 step per TensorCore (v7x).
        tb = max(8, min(tb, _round_up(pl.cdiv(B, num_tensorcores), 8)))
    tv = max(128, min(tv, _round_up(V, 128)))

    grid = (pl.cdiv(B, tb), 2, pl.cdiv(V, tv))  # (batch, sweep, vocab)

    # Glue: embedding row gather (pure indexing) + bf16 cast of the gathered
    # rows only; W is already prepared in bf16 by the caller (hoisted).
    # TODO(synk): fuse the gather into the kernel via scalar-prefetch row
    # gather for very large training batches.
    embeds = jnp.take(emb_table, inputs, axis=0).astype(jnp.bfloat16)
    w_t = linear_w_t.astype(jnp.bfloat16)  # no-op when already bf16

    vmem_bytes = (2 * tb * E * 2        # embeds tile, double-buffered bf16
                  + 2 * tv * E * 2      # W tile, double-buffered bf16
                  + 2 * tb * tv * 4     # log-prob tile, double-buffered f32
                  + 2 * tb * 128 * 4)   # two (tb,1) f32 accumulators (lane-padded)
    cap = _vmem_capacity_bytes()
    vmem_limit = int(min((3 * cap) // 4, max(32 * 2**20, 2 * vmem_bytes)))

    return pl.pallas_call(
        _make_skipgram_kernel(V, tv),
        out_shape=jax.ShapeDtypeStruct((B, V), jnp.float32),
        grid_spec=pltpu.PrefetchScalarGridSpec(
            num_scalar_prefetch=0,
            grid=grid,
            in_specs=[
                pl.BlockSpec((tb, E), lambda i, p, j: (i, 0)),  # embeds batch tile
                pl.BlockSpec((E, tv), lambda i, p, j: (0, j)),  # W vocab tile (E,V)
            ],
            # Held at (i, 0) during sweep 0 (no writeback of untouched data),
            # then (i, j) during sweep 1 when real log-probs are written.
            out_specs=pl.BlockSpec((tb, tv), lambda i, p, j: (i, p * j)),
            scratch_shapes=[pltpu.VMEM((tb, 1), jnp.float32),   # running max / lse
                            pltpu.VMEM((tb, 1), jnp.float32)],  # running sum
        ),
        compiler_params=pltpu.CompilerParams(
            dimension_semantics=("parallel", "arbitrary", "arbitrary"),
            vmem_limit_bytes=vmem_limit),
    )(embeds, w_t)


if __name__ == "__main__":
    # Small shapes consistent with the module; tv=256 exercises multi-tile LSE
    # accumulation plus the ragged last vocab tile, and BATCH=50 exercises the
    # ragged batch edge (no padding copies anywhere).
    VOCAB = 1000
    EMBED = 128
    BATCH = 50

    key = jax.random.PRNGKey(0)
    k_emb, k_w, k_idx = jax.random.split(key, 3)

    # Deterministic init matching PyTorch distributions:
    #   nn.Embedding: N(0, 1); nn.Linear(bias=False): U(-1/sqrt(E), 1/sqrt(E)).
    emb_table = jax.random.normal(k_emb, (VOCAB, EMBED), dtype=jnp.float32)
    bound = 1.0 / float(EMBED) ** 0.5
    linear_w = jax.random.uniform(k_w, (VOCAB, EMBED), dtype=jnp.float32,
                                  minval=-bound, maxval=bound)
    inputs = jax.random.randint(k_idx, (BATCH,), 0, VOCAB, dtype=jnp.int32)

    # One-time weight prep (bf16 + transpose) hoisted out of the step path.
    w_t = prepare_linear_weight(linear_w)
    n_cores = max(1, int(getattr(jax.devices()[0], "num_cores", 1) or 1))

    log_probs = jax.block_until_ready(
        skipgram_forward(inputs, emb_table, w_t, tv=256,
                         num_tensorcores=n_cores))
    assert log_probs.shape == (BATCH, VOCAB)
    assert log_probs.dtype == jnp.float32

    # Reference 1: identical bf16 input rounding, f32 math (tight tolerance).
    emb_bf = jnp.take(emb_table, inputs, axis=0).astype(jnp.bfloat16).astype(jnp.float32)
    w_bf = linear_w.astype(jnp.bfloat16).astype(jnp.float32)
    ref_bf16 = jax.nn.log_softmax(emb_bf @ w_bf.T, axis=1)
    assert jnp.allclose(log_probs, ref_bf16, atol=2e-3, rtol=2e-3)

    # Reference 2: full-f32 PyTorch semantics (loose tolerance for bf16 inputs).
    ref_f32 = jax.nn.log_softmax(
        jnp.take(emb_table, inputs, axis=0) @ linear_w.T, axis=1)
    assert jnp.max(jnp.abs(log_probs - ref_f32)) < 1e-1

    print("KERNEL_OK")
</pallas_src>

<mosaic_0001>
module attributes {stable_mosaic.version = 11 : i64} {
  func.func @kernel(%arg0: i32, %arg1: i32, %arg2: i32, %arg3: memref<56x128xbf16, #tpu.memory_space<vmem>>, %arg4: memref<128x256xbf16, #tpu.memory_space<vmem>>, %arg5: memref<56x256xf32, #tpu.memory_space<vmem>>, %arg6: memref<56x1xf32, #tpu.memory_space<vmem>>, %arg7: memref<56x1xf32, #tpu.memory_space<vmem>>) attributes {dimension_semantics = [#tpu.dimension_semantics<parallel>, #tpu.dimension_semantics<arbitrary>, #tpu.dimension_semantics<arbitrary>], iteration_bounds = array<i64: 1, 2, 4>, scalar_prefetch = 0 : i64, scratch_operands = 2 : i64, tpu.core_type = #tpu.core_type<tc>, window_params = [{transform_indices = @transform_0, window_bounds = array<i64: 56, 128>}, {transform_indices = @transform_1, window_bounds = array<i64: 128, 256>}, {transform_indices = @transform_2, window_bounds = array<i64: 56, 256>}]} {
    %c0_i32 = arith.constant 0 : i32
    %0 = arith.cmpi eq, %arg1, %c0_i32 : i32
    %c0_i32_0 = arith.constant 0 : i32
    %1 = arith.cmpi eq, %arg2, %c0_i32_0 : i32
    %2 = arith.andi %0, %1 : i1
    %3 = arith.extui %2 : i1 to i32
    %c0_i32_1 = arith.constant 0 : i32
    %4 = arith.cmpi ne, %3, %c0_i32_1 : i32
    scf.if %4 {
      %cst_10 = arith.constant 0xFF800000 : f32
      %19 = vector.broadcast %cst_10 : f32 to vector<56x1xf32>
      %c0_11 = arith.constant 0 : index
      %c0_12 = arith.constant 0 : index
      %20 = vector.load %arg6[%c0_11, %c0_12] : memref<56x1xf32, #tpu.memory_space<vmem>>, vector<56x1xf32>
      tpu.vector_store %arg6[%c0_11, %c0_12], %19 {strides = array<i32>} : memref<56x1xf32, #tpu.memory_space<vmem>>, vector<56x1xf32>,
      %cst_13 = arith.constant 0.000000e+00 : f32
      %21 = vector.broadcast %cst_13 : f32 to vector<56x1xf32>
      %c0_14 = arith.constant 0 : index
      %c0_15 = arith.constant 0 : index
      %22 = vector.load %arg7[%c0_14, %c0_15] : memref<56x1xf32, #tpu.memory_space<vmem>>, vector<56x1xf32>
      tpu.vector_store %arg7[%c0_14, %c0_15], %21 {strides = array<i32>} : memref<56x1xf32, #tpu.memory_space<vmem>>, vector<56x1xf32>,
    } else {
    }
    %c0 = arith.constant 0 : index
    %c0_2 = arith.constant 0 : index
    %5 = vector.load %arg3[%c0, %c0_2] : memref<56x128xbf16, #tpu.memory_space<vmem>>, vector<56x128xbf16>
    %c0_3 = arith.constant 0 : index
    %c0_4 = arith.constant 0 : index
    %6 = vector.load %arg4[%c0_3, %c0_4] : memref<128x256xbf16, #tpu.memory_space<vmem>>, vector<128x256xbf16>
    %cst = arith.constant dense<0.000000e+00> : vector<56x256xf32>
    %7 = tpu.matmul %5, %6, %cst {dimension_numbers = #tpu.dot_dimension_numbers<[1], [0], [0], [1], [0, 0, 1, 1], [], []>} : vector<56x128xbf16>, vector<128x256xbf16>, vector<56x256xf32> -> vector<56x256xf32>
    %c0_i32_5 = arith.constant 0 : i32
    %8 = arith.cmpi eq, %arg1, %c0_i32_5 : i32
    %9 = arith.extui %8 : i1 to i32
    %c0_i32_6 = arith.constant 0 : i32
    %10 = arith.cmpi ne, %9, %c0_i32_6 : i32
    scf.if %10 {
      %c256_i32 = arith.constant 256 : i32
      %19 = arith.muli %arg2, %c256_i32 : i32
      %20 = tpu.iota {dimensions = array<i32: 1>} : vector<56x256xi32>
      %21 = vector.broadcast %19 : i32 to vector<56x256xi32>
      %22 = arith.addi %21, %20 : vector<56x256xi32>
      %c1000_i32 = arith.constant 1000 : i32
      %23 = vector.broadcast %c1000_i32 : i32 to vector<56x256xi32>
      %24 = arith.cmpi slt, %22, %23 : vector<56x256xi32>
      %cst_10 = arith.constant 0xFF800000 : f32
      %25 = vector.broadcast %cst_10 : f32 to vector<56x256xf32>
      %26 = arith.select %24, %7, %25 : vector<56x256xi1>, vector<56x256xf32>
      %c0_11 = arith.constant 0 : index
      %c0_12 = arith.constant 0 : index
      %27 = vector.load %arg6[%c0_11, %c0_12] : memref<56x1xf32, #tpu.memory_space<vmem>>, vector<56x1xf32>
      %cst_13 = arith.constant dense<0xFF800000> : vector<56xf32>
      %28 = vector.multi_reduction <maximumf>, %26, %cst_13 [1] : vector<56x256xf32> to vector<56xf32>
      %29 = vector.shape_cast %28 : vector<56xf32> to vector<56x1xf32>
      %30 = arith.maximumf %27, %29 : vector<56x1xf32>
      %c0_14 = arith.constant 0 : index
      %c0_15 = arith.constant 0 : index
      %31 = vector.load %arg7[%c0_14, %c0_15] : memref<56x1xf32, #tpu.memory_space<vmem>>, vector<56x1xf32>
      %32 = arith.subf %27, %30 : vector<56x1xf32>
      %33 = math.exp %32 : vector<56x1xf32>
      %34 = arith.mulf %31, %33 : vector<56x1xf32>
      %35 = vector.broadcast %30 : vector<56x1xf32> to vector<56x256xf32>
      %36 = arith.subf %26, %35 : vector<56x256xf32>
      %37 = math.exp %36 : vector<56x256xf32>
      %cst_16 = arith.constant dense<0.000000e+00> : vector<56xf32>
      %38 = vector.multi_reduction <add>, %37, %cst_16 [1] : vector<56x256xf32> to vector<56xf32>
      %39 = vector.shape_cast %38 : vector<56xf32> to vector<56x1xf32>
      %40 = arith.addf %34, %39 : vector<56x1xf32>
      %c0_17 = arith.constant 0 : index
      %c0_18 = arith.constant 0 : index
      %41 = vector.load %arg7[%c0_17, %c0_18] : memref<56x1xf32, #tpu.memory_space<vmem>>, vector<56x1xf32>
      tpu.vector_store %arg7[%c0_17, %c0_18], %40 {strides = array<i32>} : memref<56x1xf32, #tpu.memory_space<vmem>>, vector<56x1xf32>,
      %c0_19 = arith.constant 0 : index
      %c0_20 = arith.constant 0 : index
      %42 = vector.load %arg6[%c0_19, %c0_20] : memref<56x1xf32, #tpu.memory_space<vmem>>, vector<56x1xf32>
      tpu.vector_store %arg6[%c0_19, %c0_20], %30 {strides = array<i32>} : memref<56x1xf32, #tpu.memory_space<vmem>>, vector<56x1xf32>,
    } else {
    }
    %c0_i32_7 = arith.constant 0 : i32
    %11 = arith.cmpi eq, %arg1, %c0_i32_7 : i32
    %c3_i32 = arith.constant 3 : i32
    %12 = arith.cmpi eq, %arg2, %c3_i32 : i32
    %13 = arith.andi %11, %12 : i1
    %14 = arith.extui %13 : i1 to i32
    %c0_i32_8 = arith.constant 0 : i32
    %15 = arith.cmpi ne, %14, %c0_i32_8 : i32
    scf.if %15 {
      %c0_10 = arith.constant 0 : index
      %c0_11 = arith.constant 0 : index
      %19 = vector.load %arg6[%c0_10, %c0_11] : memref<56x1xf32, #tpu.memory_space<vmem>>, vector<56x1xf32>
      %c0_12 = arith.constant 0 : index
      %c0_13 = arith.constant 0 : index
      %20 = vector.load %arg7[%c0_12, %c0_13] : memref<56x1xf32, #tpu.memory_space<vmem>>, vector<56x1xf32>
      %21 = math.log %20 : vector<56x1xf32>
      %22 = arith.addf %19, %21 : vector<56x1xf32>
      %c0_14 = arith.constant 0 : index
      %c0_15 = arith.constant 0 : index
      %23 = vector.load %arg6[%c0_14, %c0_15] : memref<56x1xf32, #tpu.memory_space<vmem>>, vector<56x1xf32>
      tpu.vector_store %arg6[%c0_14, %c0_15], %22 {strides = array<i32>} : memref<56x1xf32, #tpu.memory_space<vmem>>, vector<56x1xf32>,
    } else {
    }
    %c1_i32 = arith.constant 1 : i32
    %16 = arith.cmpi eq, %arg1, %c1_i32 : i32
    %17 = arith.extui %16 : i1 to i32
    %c0_i32_9 = arith.constant 0 : i32
    %18 = arith.cmpi ne, %17, %c0_i32_9 : i32
    scf.if %18 {
      %c0_10 = arith.constant 0 : index
      %c0_11 = arith.constant 0 : index
      %19 = vector.load %arg6[%c0_10, %c0_11] : memref<56x1xf32, #tpu.memory_space<vmem>>, vector<56x1xf32>
      %20 = vector.broadcast %19 : vector<56x1xf32> to vector<56x256xf32>
      %21 = arith.subf %7, %20 : vector<56x256xf32>
      %c0_12 = arith.constant 0 : index
      %c0_13 = arith.constant 0 : index
      %22 = vector.load %arg5[%c0_12, %c0_13] : memref<56x256xf32, #tpu.memory_space<vmem>>, vector<56x256xf32>
      tpu.vector_store %arg5[%c0_12, %c0_13], %21 {strides = array<i32>} : memref<56x256xf32, #tpu.memory_space<vmem>>, vector<56x256xf32>,
    } else {
    }
    return
  }
  func.func @transform_0(%arg0: i32, %arg1: i32, %arg2: i32) -> (i32, i32) {
    %c0_i32 = arith.constant 0 : i32
    %c0_i32_0 = arith.constant 0 : i32
    return %arg0, %c0_i32 : i32, i32
  }
  func.func @transform_1(%arg0: i32, %arg1: i32, %arg2: i32) -> (i32, i32) {
    %c0_i32 = arith.constant 0 : i32
    %c0_i32_0 = arith.constant 0 : i32
    return %c0_i32, %arg2 : i32, i32
  }
  func.func @transform_2(%arg0: i32, %arg1: i32, %arg2: i32) -> (i32, i32) {
    %0 = arith.muli %arg1, %arg2 : i32
    %c0_i32 = arith.constant 0 : i32
    return %arg0, %0 : i32, i32
  }
}

</mosaic_0001>

<llo_original>
// kernel: skipgram_forward.1
$region0: #{skipgram_forward.1}
  #allocation0 [shape = 'u32[]', space=smem, size = 0x4, offset = 0x4, fixed_abs, tag = 'smem constant byte address 0x4 - core index']
  #allocation1 [shape = 'u32[72,128]{1,0:T(1,128)}', space=vmem, size = 0x9000, scoped, tag = 'internal scratch']
  #allocation2 [shape = 'f32[56,1]{1,0:T(8,128)}', space=vmem, size = 0x7000, scoped, tag = 'scratch operand']
  #allocation3 [shape = 'f32[56,1]{1,0:T(8,128)}', space=vmem, size = 0x7000, scoped, tag = 'scratch operand']
  %s0 = inlined_call_operand.vmem [shape: bf16[50,128], index: 0, kind: input, shape index: {}]
  %s1 = inlined_call_operand.vmem [shape: bf16[128,1000], index: 1, kind: input, shape index: {}]
  %s2 = inlined_call_operand.hbm [shape: f32[50,1000], index: 2, kind: output, shape index: {}]
  %s3 = sld [smem:[#allocation0]]
  $region95: #{skipgram_forward.1} parent=0
    _
  %s5 = ssub.s32 1, %s3
  %s6 = scalar_select 0, %s5, %s3
  $region1: #{skipgram_forward.1} parent=0
    #allocation4 [shape = 'u8[131072]{0}', space=vmem, size = 0x20000, scoped, tag = 'input window, operand 1']
    #allocation5 [shape = 'u8[114688]{0}', space=vmem, size = 0x1c000, scoped, tag = 'output window, operand 0']
    #allocation6 [shape = 's32[2]{0}', space=sflag, size = 0x8, scoped, tag = 'scoped memory for skipgram_forward.1']
    %7 = vsyncpa [#allocation6], 0
    %s8 = scalar_lea.sflag [#allocation6], 1
    %9 = vsyncpa %s8, 0
    loop: start=0, step=1, limit=10
    $region2: #{skipgram_forward.1} parent=1 // loop_pre_header
      _
    $region3: #{skipgram_forward.1} parent=1 // loop_header
      %s11 = sphi 0, %s15
      %p12 = scmp.ge.s32.totalorder %s11, 10
      %s18 = sphi 0, %s37
      %s19 = sphi 0, %s33
      %s20 = sphi 0, %s29
      %s21 = sphi 0, %s18
      %s22 = sphi 0, %s19
      %s23 = sphi 0, %s20
      %s24 = sphi 0, %s21
      %s25 = sphi 0, %s22
      %s26 = sphi 0, %s23
      %s40 = sphi 0, %s42
      %s43 = sphi 0, %s40
      %s44 = sphi 0, %s43
      %s60 = sphi 0, %s44
      %s66 = sphi 0, %s68
      %s69 = sphi 0, %s66
      %s70 = sphi 0, %s69
      %s86 = sphi 0, %s70
      %s96 = sphi 0, %s98
      %s99 = sphi 0, %s96
      %s100 = sphi 0, %s99
      %s116 = sphi 0, %s100
    $region4: #{skipgram_forward.1} parent=1 // loop_header_branch
      %14 = sbr.rel (%p12) target = $region8
    $region5: #{skipgram_forward.1} parent=1 // loop_body
      %s16 = ssub.s32 %s11, 1
      %s17 = ssub.s32 %s11, 2
      %s27 = sadd.s32 1, %s20
      %p28 = scmp.ge.s32.totalorder %s27, 4
      %s29 = scalar_select %p28, 0, %s27
      %s30 = sadd.s32 1, %s19
      %s31 = scalar_select %p28, %s30, %s19
      %p32 = scmp.ge.s32.totalorder %s31, 2
      %s33 = scalar_select %p32, 0, %s31
      %s34 = sadd.s32 1, %s18
      %s35 = scalar_select %p32, %s34, %s18
      %p36 = scmp.ge.s32.totalorder %s35, 1
      %s37 = scalar_select %p36, 0, %s35
      %s38 = ssub.s32 %s18, %s37
      %p39 = scmp.eq.s32.totalorder %s38, 0
      %s41 = sadd.s32 %s40, 1
      %s42 = scalar_select %p39, %s40, %s41
      %p45 = pneg %p39
      %p46 = scmp.eq.s32.totalorder %s11, 7
      %p47 = por %p45, %p46
      %p48 = scmp.ne.s32.totalorder %s40, %s43
      %p49 = scmp.eq.s32.totalorder %s11, 0
      %p50 = por %p48, %p49
      %p51 = scmp.ne.s32.totalorder %s40, %s43
      %p52 = scmp.eq.s32.totalorder %s16, 7
      %p53 = por %p51, %p52
      %p54 = scmp.ne.s32.totalorder %s43, %s44
      %p55 = scmp.eq.s32.totalorder %s16, 0
      %p56 = por %p54, %p55
      %p57 = scmp.ne.s32.totalorder %s43, %s44
      %p58 = scmp.eq.s32.totalorder %s17, 7
      %p59 = por %p57, %p58
      %p61 = scmp.ne.s32.totalorder %s44, %s60
      %p62 = scmp.eq.s32.totalorder %s17, 0
      %p63 = por %p61, %p62
      %s64 = ssub.s32 %s20, %s29
      %p65 = scmp.eq.s32.totalorder %s64, 0
      %s67 = sadd.s32 %s66, 1
      %s68 = scalar_select %p65, %s66, %s67
      %p71 = pneg %p65
      %p72 = scmp.eq.s32.totalorder %s11, 7
      %p73 = por %p71, %p72
      %p74 = scmp.ne.s32.totalorder %s66, %s69
      %p75 = scmp.eq.s32.totalorder %s11, 0
      %p76 = por %p74, %p75
      %p77 = scmp.ne.s32.totalorder %s66, %s69
      %p78 = scmp.eq.s32.totalorder %s16, 7
      %p79 = por %p77, %p78
      %p80 = scmp.ne.s32.totalorder %s69, %s70
      %p81 = scmp.eq.s32.totalorder %s16, 0
      %p82 = por %p80, %p81
      %p83 = scmp.ne.s32.totalorder %s69, %s70
      %p84 = scmp.eq.s32.totalorder %s17, 7
      %p85 = por %p83, %p84
      %p87 = scmp.ne.s32.totalorder %s70, %s86
      %p88 = scmp.eq.s32.totalorder %s17, 0
      %p89 = por %p87, %p88
      %s90 = smul.u32 %s19, %s20
      %s91 = smul.u32 %s33, %s29
      %s92 = ssub.s32 %s18, %s37
      %s93 = ssub.s32 %s90, %s91
      %s94 = sor.u32 %s92, %s93
      %p95 = scmp.eq.s32.totalorder %s94, 0
      %s97 = sadd.s32 %s96, 1
      %s98 = scalar_select %p95, %s96, %s97
      %p101 = pneg %p95
      %p102 = scmp.eq.s32.totalorder %s11, 7
      %p103 = por %p101, %p102
      %p104 = scmp.ne.s32.totalorder %s96, %s99
      %p105 = scmp.eq.s32.totalorder %s11, 0
      %p106 = por %p104, %p105
      %p107 = scmp.ne.s32.totalorder %s96, %s99
      %p108 = scmp.eq.s32.totalorder %s16, 7
      %p109 = por %p107, %p108
      %p110 = scmp.ne.s32.totalorder %s99, %s100
      %p111 = scmp.eq.s32.totalorder %s16, 0
      %p112 = por %p110, %p111
      %p113 = scmp.ne.s32.totalorder %s99, %s100
      %p114 = scmp.eq.s32.totalorder %s17, 7
      %p115 = por %p113, %p114
      %p117 = scmp.ne.s32.totalorder %s100, %s116
      %p118 = scmp.eq.s32.totalorder %s17, 0
      %p119 = por %p117, %p118
      %p120 = scmp.le.s32.totalorder 1, %s11
      %p121 = scmp.lt.s32.totalorder %s11, 9
      %p122 = pnand %p120, %p121
      %p123 = pneg %p122
      // Predicated region
      $region9: #{skipgram_forward.1} parent=5 // pred_check
        _
      $region10: #{skipgram_forward.1} parent=5 // pred_check_branch
        %125 = sbr.rel (%p122) target = $region12
      $region11: #{skipgram_forward.1} parent=5 // pred_region
        %s126 = ssub.s32 %s11, 1
        // Predicated region
        $region13: #{skipgram_forward.1} parent=11 // pred_check
          %p127 = pneg %p56
        $region14: #{skipgram_forward.1} parent=11 // pred_check_branch
          %129 = sbr.rel (%p127) target = $region16
        $region15: #{skipgram_forward.1} parent=11 // pred_region
          %s130 = smul.u32 7, %s21
          %p131 = scmp.lt.s32.totalorder %s130, 6
          %s132 = scalar_select %p131, %s130, 6
          %s133 = smul.addr %s132, 4
          %s134 = scalar_lea.vmem %s0, %s133
          %s135 = smul.u32 7, %s21
        $region16: #{skipgram_forward.1} parent=11 // pred_fallthru
          _
      $region12: #{skipgram_forward.1} parent=5 // pred_fallthru
        _
      %p136 = scmp.lt.s32.totalorder %s11, 8
      // Predicated region
      $region17: #{skipgram_forward.1} parent=5 // pred_check
        %p137 = pneg %p136
      $region18: #{skipgram_forward.1} parent=5 // pred_check_branch
        %139 = sbr.rel (%p137) target = $region20
      $region19: #{skipgram_forward.1} parent=5 // pred_region
        // Predicated region
        $region21: #{skipgram_forward.1} parent=19 // pred_check
          %p140 = pneg %p76
        $region22: #{skipgram_forward.1} parent=19 // pred_check_branch
          %142 = sbr.rel (%p140) target = $region24
        $region23: #{skipgram_forward.1} parent=19 // pred_region
          %s143 = sand.u32 %s66, 1
          %s144 = sand.u32 %s66, 1
          %s145 = smul.addr %s144, 128
          %s146 = scalar_lea.vmem [#allocation4], %s145
          %s147 = smul.u32 2, %s20
          %s148 = smul.addr %s147, 4
          %s149 = scalar_lea.vmem %s1, %s148
          // Predicated region
          $region25: #{skipgram_forward.1} parent=23 // pred_check
            _
          $region26: #{skipgram_forward.1} parent=23 // pred_check_branch
            %151 = sbr.rel (0) target = $region28
          $region27: #{skipgram_forward.1} parent=23 // pred_region
            // Predicated region
            $region29: #{skipgram_forward.1} parent=27 // pred_check
              _
            $region30: #{skipgram_forward.1} parent=27 // pred_check_branch
              %153 = sbr.rel (0) target = $region32
            $region31: #{skipgram_forward.1} parent=27 // pred_region
              // Predicated region
              $region44: #{skipgram_forward.1} parent=31 // pred_check
                _
              $region45: #{skipgram_forward.1} parent=31 // pred_check_branch
                %199 = sbr.rel (0) target = $region47
              $region46: #{skipgram_forward.1} parent=31 // pred_region
                loop: start=0, step=1, limit=1
                $region48: #{skipgram_forward.1} parent=46 // loop_pre_header
                  _
                $region49: #{skipgram_forward.1} parent=46 // loop_header
                  %s201 = sphi 0, %s205
                  %p202 = scmp.ge.s32.totalorder %s201, 1
                  %s206 = sphi %s149, %s149
                  %s207 = sphi %s146, %s146
                $region50: #{skipgram_forward.1} parent=46 // loop_header_branch
                  %204 = sbr.rel (%p202) target = $region54
                $region51: #{skipgram_forward.1} parent=46 // loop_body
                  %v208 = vld [vmem:[%s206] sm:$0xff]
                  %209 = vst [vmem:[%s207] sm:$0xff] %v208
                  %v210 = vld [vmem:[%s206 + $0x20] sm:$0xff]
                  %211 = vst [vmem:[%s207 + $0x8] sm:$0xff] %v210
                  %v212 = vld [vmem:[%s206 + $0x40] sm:$0xff]
                  %213 = vst [vmem:[%s207 + $0x10] sm:$0xff] %v212
                  %v214 = vld [vmem:[%s206 + $0x60] sm:$0xff]
                  %215 = vst [vmem:[%s207 + $0x18] sm:$0xff] %v214
                  %v216 = vld [vmem:[%s206 + $0x80] sm:$0xff]
                  %217 = vst [vmem:[%s207 + $0x20] sm:$0xff] %v216
                  %v218 = vld [vmem:[%s206 + $0xa0] sm:$0xff]
                  %219 = vst [vmem:[%s207 + $0x28] sm:$0xff] %v218
                  %v220 = vld [vmem:[%s206 + $0xc0] sm:$0xff]
                  %221 = vst [vmem:[%s207 + $0x30] sm:$0xff] %v220
                  %v222 = vld [vmem:[%s206 + $0xe0] sm:$0xff]
                  %223 = vst [vmem:[%s207 + $0x38] sm:$0xff] %v222
                  %v224 = vld [vmem:[%s206 + $0x100] sm:$0xff]
                  %225 = vst [vmem:[%s207 + $0x40] sm:$0xff] %v224
                  %v226 = vld [vmem:[%s206 + $0x120] sm:$0xff]
                  %227 = vst [vmem:[%s207 + $0x48] sm:$0xff] %v226
                  %v228 = vld [vmem:[%s206 + $0x140] sm:$0xff]
                  %229 = vst [vmem:[%s207 + $0x50] sm:$0xff] %v228
                  %v230 = vld [vmem:[%s206 + $0x160] sm:$0xff]
                  %231 = vst [vmem:[%s207 + $0x58] sm:$0xff] %v230
                  %v232 = vld [vmem:[%s206 + $0x180] sm:$0xff]
                  %233 = vst [vmem:[%s207 + $0x60] sm:$0xff] %v232
                  %v234 = vld [vmem:[%s206 + $0x1a0] sm:$0xff]
                  %235 = vst [vmem:[%s207 + $0x68] sm:$0xff] %v234
                  %v236 = vld [vmem:[%s206 + $0x1c0] sm:$0xff]
                  %237 = vst [vmem:[%s207 + $0x70] sm:$0xff] %v236
                  %v238 = vld [vmem:[%s206 + $0x1e0] sm:$0xff]
                  %239 = vst [vmem:[%s207 + $0x78] sm:$0xff] %v238
                $region52: #{skipgram_forward.1} parent=46 // loop_footer
                  %s205 = sadd.s32 1, %s201
                $region53: #{skipgram_forward.1} parent=46 // loop_footer_branch
                  %200 = sbr.rel target = $region49
                $region54: #{skipgram_forward.1} parent=46 // loop_exit
                  _
              $region47: #{skipgram_forward.1} parent=31 // pred_fallthru
                _
              // Predicated region
              $region55: #{skipgram_forward.1} parent=31 // pred_check
                _
              $region56: #{skipgram_forward.1} parent=31 // pred_check_branch
                %241 = sbr.rel target = $region58
              $region57: #{skipgram_forward.1} parent=31 // pred_region
                _
              $region58: #{skipgram_forward.1} parent=31 // pred_fallthru
                _
            $region32: #{skipgram_forward.1} parent=27 // pred_fallthru
              _
            // Predicated region
            $region33: #{skipgram_forward.1} parent=27 // pred_check
              _
            $region34: #{skipgram_forward.1} parent=27 // pred_check_branch
              %155 = sbr.rel target = $region36
            $region35: #{skipgram_forward.1} parent=27 // pred_region
              %s157 = ssub.s32 256, 1
              loop: start=0, step=1, limit=1
              $region37: #{skipgram_forward.1} parent=35 // loop_pre_header
                _
              $region38: #{skipgram_forward.1} parent=35 // loop_header
                %s159 = sphi 0, %s163
                %p160 = scmp.ge.s32.totalorder %s159, 1
                %s164 = sphi %s149, %s149
                %s165 = sphi %s146, %s146
              $region39: #{skipgram_forward.1} parent=35 // loop_header_branch
                %162 = sbr.rel (%p160) target = $region43
              $region40: #{skipgram_forward.1} parent=35 // loop_body
                %v166 = vld [vmem:[%s164] sm:%s157]
                %167 = vst [vmem:[%s165] sm:%s157] %v166
                %v168 = vld [vmem:[%s164 + $0x20] sm:%s157]
                %169 = vst [vmem:[%s165 + $0x8] sm:%s157] %v168
                %v170 = vld [vmem:[%s164 + $0x40] sm:%s157]
                %171 = vst [vmem:[%s165 + $0x10] sm:%s157] %v170
                %v172 = vld [vmem:[%s164 + $0x60] sm:%s157]
                %173 = vst [vmem:[%s165 + $0x18] sm:%s157] %v172
                %v174 = vld [vmem:[%s164 + $0x80] sm:%s157]
                %175 = vst [vmem:[%s165 + $0x20] sm:%s157] %v174
                %v176 = vld [vmem:[%s164 + $0xa0] sm:%s157]
                %177 = vst [vmem:[%s165 + $0x28] sm:%s157] %v176
                %v178 = vld [vmem:[%s164 + $0xc0] sm:%s157]
                %179 = vst [vmem:[%s165 + $0x30] sm:%s157] %v178
                %v180 = vld [vmem:[%s164 + $0xe0] sm:%s157]
                %181 = vst [vmem:[%s165 + $0x38] sm:%s157] %v180
                %v182 = vld [vmem:[%s164 + $0x100] sm:%s157]
                %183 = vst [vmem:[%s165 + $0x40] sm:%s157] %v182
                %v184 = vld [vmem:[%s164 + $0x120] sm:%s157]
                %185 = vst [vmem:[%s165 + $0x48] sm:%s157] %v184
                %v186 = vld [vmem:[%s164 + $0x140] sm:%s157]
                %187 = vst [vmem:[%s165 + $0x50] sm:%s157] %v186
                %v188 = vld [vmem:[%s164 + $0x160] sm:%s157]
                %189 = vst [vmem:[%s165 + $0x58] sm:%s157] %v188
                %v190 = vld [vmem:[%s164 + $0x180] sm:%s157]
                %191 = vst [vmem:[%s165 + $0x60] sm:%s157] %v190
                %v192 = vld [vmem:[%s164 + $0x1a0] sm:%s157]
                %193 = vst [vmem:[%s165 + $0x68] sm:%s157] %v192
                %v194 = vld [vmem:[%s164 + $0x1c0] sm:%s157]
                %195 = vst [vmem:[%s165 + $0x70] sm:%s157] %v194
                %v196 = vld [vmem:[%s164 + $0x1e0] sm:%s157]
                %197 = vst [vmem:[%s165 + $0x78] sm:%s157] %v196
              $region41: #{skipgram_forward.1} parent=35 // loop_footer
                %s163 = sadd.s32 1, %s159
              $region42: #{skipgram_forward.1} parent=35 // loop_footer_branch
                %158 = sbr.rel target = $region38
              $region43: #{skipgram_forward.1} parent=35 // loop_exit
                _
            $region36: #{skipgram_forward.1} parent=27 // pred_fallthru
              _
          $region28: #{skipgram_forward.1} parent=23 // pred_fallthru
            _
          %242 = vnop
        $region24: #{skipgram_forward.1} parent=19 // pred_fallthru
          _
      $region20: #{skipgram_forward.1} parent=5 // pred_fallthru
        _
      %p243 = scmp.le.s32.totalorder 1, %s11
      %p244 = scmp.lt.s32.totalorder %s11, 9
      %p245 = pnand %p243, %p244
      %p246 = pneg %p245
      // Predicated region
      $region59: #{skipgram_forward.1} parent=5 // pred_check
        _
      $region60: #{skipgram_forward.1} parent=5 // pred_check_branch
        %248 = sbr.rel (%p245) target = $region62
      $region61: #{skipgram_forward.1} parent=5 // pred_region
        %s249 = ssub.s32 %s11, 1
        %s250 = sand.u32 %s69, 1
        %s251 = sand.u32 %s69, 1
        %s252 = smul.addr %s251, 128
        %s253 = scalar_lea.vmem [#allocation4], %s252
        // Predicated region
        $region63: #{skipgram_forward.1} parent=61 // pred_check
          %p254 = pneg %p82
        $region64: #{skipgram_forward.1} parent=61 // pred_check_branch
          %256 = sbr.rel (%p254) target = $region66
        $region65: #{skipgram_forward.1} parent=61 // pred_region
          _
        $region66: #{skipgram_forward.1} parent=61 // pred_fallthru
          _
        %s257 = smul.u32 7, %s21
        %p258 = scmp.lt.s32.totalorder %s257, 6
        %s259 = scalar_select %p258, %s257, 6
        %s260 = smul.addr %s259, 4
        %s261 = scalar_lea.vmem %s0, %s260
        %p262 = pneg %p56
        %p263 = pneg %p53
        %s264 = sand.u32 %s69, 1
        %s265 = sand.u32 %s69, 1
        %s266 = smul.addr %s265, 128
        %s267 = scalar_lea.vmem [#allocation4], %s266
        %p268 = pneg %p82
        %p269 = pneg %p79
        %p270 = pneg %p112
        %p271 = pneg %p109
        %s272 = sand.u32 %s99, 1
        %s273 = scalar_lea.sflag [#allocation6], %s272
        %s274 = sand.u32 %s99, 1
        %s275 = smul.addr %s274, 112
        %s276 = scalar_lea.vmem [#allocation5], %s275
        %s277 = smul.u32 7, %s21
        %p278 = scmp.lt.s32.totalorder %s277, 6
        %s279 = scalar_select %p278, %s277, 6
        %s280 = smul.addr %s279, 4
        %s281 = scalar_lea.vmem %s0, %s280
        %s282 = smul.u32 7, %s21
        %s283 = smul.u32 2, %s23
        %s284 = smul.u32 %s22, %s23
        %s285 = smul.u32 7, %s21
        %s286 = smul.u32 2, %s284
        %p287 = scmp.eq.s32.totalorder %s22, 0
        %p288 = scmp.eq.s32.totalorder %s23, 0
        %p289 = pnand %p287, %p288
        %p290 = pneg %p289
        // Predicated region
        $region67: #{skipgram_forward.1} parent=61 // pred_check
          _
        $region68: #{skipgram_forward.1} parent=61 // pred_check_branch
          %292 = sbr.rel (%p289) target = $region70
        $region69: #{skipgram_forward.1} parent=61 // pred_region
          %vm293 = vcmask 7168
          %294 = vst.msk [vmem:[#allocation2] sm:$0xff] %vm293, -inf
          %295 = vst.msk [vmem:[#allocation2 + $0x8] sm:$0xff] %vm293, -inf
          %296 = vst.msk [vmem:[#allocation2 + $0x10] sm:$0xff] %vm293, -inf
          %297 = vst.msk [vmem:[#allocation2 + $0x18] sm:$0xff] %vm293, -inf
          %298 = vst.msk [vmem:[#allocation2 + $0x20] sm:$0xff] %vm293, -inf
          %299 = vst.msk [vmem:[#allocation2 + $0x28] sm:$0xff] %vm293, -inf
          %300 = vst.msk [vmem:[#allocation2 + $0x30] sm:$0xff] %vm293, -inf
          %301 = vst.msk [vmem:[#allocation3] sm:$0xff] %vm293, 0.0
          %302 = vst.msk [vmem:[#allocation3 + $0x8] sm:$0xff] %vm293, 0.0
          %303 = vst.msk [vmem:[#allocation3 + $0x10] sm:$0xff] %vm293, 0.0
          %304 = vst.msk [vmem:[#allocation3 + $0x18] sm:$0xff] %vm293, 0.0
          %305 = vst.msk [vmem:[#allocation3 + $0x20] sm:$0xff] %vm293, 0.0
          %306 = vst.msk [vmem:[#allocation3 + $0x28] sm:$0xff] %vm293, 0.0
          %307 = vst.msk [vmem:[#allocation3 + $0x30] sm:$0xff] %vm293, 0.0
        $region70: #{skipgram_forward.1} parent=61 // pred_fallthru
          _
        %v308 = vld [vmem:[%s281] sm:$0xf]
        %v309 = vld [vmem:[%s281 + $0x4] sm:$0xf]
        %v310 = vld [vmem:[%s281 + $0x8] sm:$0xf]
        %v311 = vld [vmem:[%s281 + $0xc] sm:$0xf]
        %v312 = vld [vmem:[%s281 + $0x10] sm:$0xf]
        %v313 = vld [vmem:[%s281 + $0x14] sm:$0xf]
        %v314 = vld [vmem:[%s281 + $0x18] sm:$0xf]
        %v315 = vld [vmem:[%s253] sm:$0xff]
        %v316 = vld [vmem:[%s253 + $0x8] sm:$0xff]
        %v317 = vld [vmem:[%s253 + $0x10] sm:$0xff]
        %v318 = vld [vmem:[%s253 + $0x18] sm:$0xff]
        %v319 = vld [vmem:[%s253 + $0x20] sm:$0xff]
        %v320 = vld [vmem:[%s253 + $0x28] sm:$0xff]
        %v321 = vld [vmem:[%s253 + $0x30] sm:$0xff]
        %v322 = vld [vmem:[%s253 + $0x38] sm:$0xff]
        %v323 = vld [vmem:[%s253 + $0x40] sm:$0xff]
        %v324 = vld [vmem:[%s253 + $0x48] sm:$0xff]
        %v325 = vld [vmem:[%s253 + $0x50] sm:$0xff]
        %v326 = vld [vmem:[%s253 + $0x58] sm:$0xff]
        %v327 = vld [vmem:[%s253 + $0x60] sm:$0xff]
        %v328 = vld [vmem:[%s253 + $0x68] sm:$0xff]
        %v329 = vld [vmem:[%s253 + $0x70] sm:$0xff]
        %v330 = vld [vmem:[%s253 + $0x78] sm:$0xff]
        %v338 = vunpack.c.l.b16 %v308
        %v339 = vunpack.c.l.b16 %v309
        %v340 = vunpack.c.l.b16 %v310
        %v341 = vunpack.c.l.b16 %v311
        %v342 = vunpack.c.l.b16 %v312
        %v343 = vunpack.c.l.b16 %v313
        %v344 = vunpack.c.l.b16 %v314
        %v345 = vpack.c.b16 %v339, %v338
        %v346 = vpack.c.b16 %v341, %v340
        %v347 = vpack.c.b16 %v343, %v342
        %v348 = vpack.c.b16 %v344, %v344
        %v369 = vunpack.c.l.b16 %v315
        %v370 = vunpack.c.h.b16 %v315
        %v371 = vunpack.c.l.b16 %v316
        %v372 = vunpack.c.h.b16 %v316
        %v373 = vunpack.c.l.b16 %v317
        %v374 = vunpack.c.h.b16 %v317
        %v375 = vunpack.c.l.b16 %v318
        %v376 = vunpack.c.h.b16 %v318
        %v377 = vunpack.c.l.b16 %v319
        %v378 = vunpack.c.h.b16 %v319
        %v379 = vunpack.c.l.b16 %v320
        %v380 = vunpack.c.h.b16 %v320
        %v381 = vunpack.c.l.b16 %v321
        %v382 = vunpack.c.h.b16 %v321
        %v383 = vunpack.c.l.b16 %v322
        %v384 = vunpack.c.h.b16 %v322
        %v385 = vunpack.c.l.b16 %v323
        %v386 = vunpack.c.h.b16 %v323
        %v387 = vunpack.c.l.b16 %v324
        %v388 = vunpack.c.h.b16 %v324
        %v389 = vunpack.c.l.b16 %v325
        %v390 = vunpack.c.h.b16 %v325
        %v391 = vunpack.c.l.b16 %v326
        %v392 = vunpack.c.h.b16 %v326
        %v393 = vunpack.c.l.b16 %v327
        %v394 = vunpack.c.h.b16 %v327
        %v395 = vunpack.c.l.b16 %v328
        %v396 = vunpack.c.h.b16 %v328
        %v397 = vunpack.c.l.b16 %v329
        %v398 = vunpack.c.h.b16 %v329
        %v399 = vunpack.c.l.b16 %v330
        %v400 = vunpack.c.h.b16 %v330
        %v401 = vpack.c.b16 %v371, %v369
        %v402 = vpack.c.b16 %v372, %v370
        %v403 = vpack.c.b16 %v375, %v373
        %v404 = vpack.c.b16 %v376, %v374
        %v405 = vpack.c.b16 %v379, %v377
        %v406 = vpack.c.b16 %v380, %v378
        %v407 = vpack.c.b16 %v383, %v381
        %v408 = vpack.c.b16 %v384, %v382
        %v409 = vpack.c.b16 %v387, %v385
        %v410 = vpack.c.b16 %v388, %v386
        %v411 = vpack.c.b16 %v391, %v389
        %v412 = vpack.c.b16 %v392, %v390
        %v413 = vpack.c.b16 %v395, %v393
        %v414 = vpack.c.b16 %v396, %v394
        %v415 = vpack.c.b16 %v399, %v397
        %v416 = vpack.c.b16 %v400, %v398
        %433 = vmatpush.bf16.msra.mxu0 %v415
        %434 = vmatpush.bf16.msra.mxu0 %v413
        %435 = vmatpush.bf16.msra.mxu0 %v411
        %436 = vmatpush.bf16.msra.mxu0 %v409
        %437 = vmatpush.bf16.msra.mxu0 %v407
        %438 = vmatpush.bf16.msra.mxu0 %v405
        %439 = vmatpush.bf16.msra.mxu0 %v403
        %440 = vmatpush.bf16.msra.mxu0 %v401
        %441 = vmatmul.bf16.gmra.mxu0 %v345
        %v442 = vpop.f32.mrf.mxu0
        %v443 = vadd.f32 0.0, %v442
        %v444 = vpop.f32.mrf.mxu0
        %v445 = vadd.f32 0.0, %v444
        %446 = vmatmul.bf16.gmra.mxu0 %v346
        %v447 = vpop.f32.mrf.mxu0
        %v448 = vadd.f32 0.0, %v447
        %v449 = vpop.f32.mrf.mxu0
        %v450 = vadd.f32 0.0, %v449
        %451 = vmatmul.bf16.gmra.mxu0 %v347
        %v452 = vpop.f32.mrf.mxu0
        %v453 = vadd.f32 0.0, %v452
        %v454 = vpop.f32.mrf.mxu0
        %v455 = vadd.f32 0.0, %v454
        %456 = vmatmul.bf16.gmra.mxu0 %v348
        %v457 = vpop.f32.mrf.mxu0
        %v458 = vadd.f32 0.0, %v457
        %v459 = vpop.f32.mrf.mxu0
        %460 = vdwg.mxu0
        %461 = vmatpush.bf16.msra.mxu0 %v416
        %462 = vmatpush.bf16.msra.mxu0 %v414
        %463 = vmatpush.bf16.msra.mxu0 %v412
        %464 = vmatpush.bf16.msra.mxu0 %v410
        %465 = vmatpush.bf16.msra.mxu0 %v408
        %466 = vmatpush.bf16.msra.mxu0 %v406
        %467 = vmatpush.bf16.msra.mxu0 %v404
        %468 = vmatpush.bf16.msra.mxu0 %v402
        %469 = vmatmul.bf16.gmra.mxu0 %v345
        %v470 = vpop.f32.mrf.mxu0
        %v471 = vadd.f32 0.0, %v470
        %v472 = vpop.f32.mrf.mxu0
        %v473 = vadd.f32 0.0, %v472
        %474 = vmatmul.bf16.gmra.mxu0 %v346
        %v475 = vpop.f32.mrf.mxu0
        %v476 = vadd.f32 0.0, %v475
        %v477 = vpop.f32.mrf.mxu0
        %v478 = vadd.f32 0.0, %v477
        %479 = vmatmul.bf16.gmra.mxu0 %v347
        %v480 = vpop.f32.mrf.mxu0
        %v481 = vadd.f32 0.0, %v480
        %v482 = vpop.f32.mrf.mxu0
        %v483 = vadd.f32 0.0, %v482
        %484 = vmatmul.bf16.gmra.mxu0 %v348
        %v485 = vpop.f32.mrf.mxu0
        %v486 = vadd.f32 0.0, %v485
        %v487 = vpop.f32.mrf.mxu0
        %488 = vdwg.mxu0
        // Predicated region
        $region71: #{skipgram_forward.1} parent=61 // pred_check
          %p489 = pneg %p287
        $region72: #{skipgram_forward.1} parent=61 // pred_check_branch
          %491 = sbr.rel (%p489) target = $region74
        $region73: #{skipgram_forward.1} parent=61 // pred_region
          %s492 = smul.u32 %s23, 256
          %v493 = vlaneseq
          %v494 = vand.u32 %v493, 127
          %v495 = vadd.s32 %v494, 128
          %v496 = vstv %s492
          %v497 = vadd.s32 %v496, %v494
          %v498 = vadd.s32 %v496, %v495
          %vm499 = vcmp.lt.s32.totalorder %v497, 1000
          %vm500 = vcmp.lt.s32.totalorder %v498, 1000
          %v501 = vsel %vm499, %v443, -inf
          %v502 = vsel %vm500, %v471, -inf
          %v503 = vsel %vm499, %v445, -inf
          %v504 = vsel %vm500, %v473, -inf
          %v505 = vsel %vm499, %v448, -inf
          %v506 = vsel %vm500, %v476, -inf
          %v507 = vsel %vm499, %v450, -inf
          %v508 = vsel %vm500, %v478, -inf
          %v509 = vsel %vm499, %v453, -inf
          %v510 = vsel %vm500, %v481, -inf
          %v511 = vsel %vm499, %v455, -inf
          %v512 = vsel %vm500, %v483, -inf
          %v513 = vsel %vm499, %v458, -inf
          %v514 = vsel %vm500, %v486, -inf
          %v515 = vld [vmem:[#allocation2] sm:$0xff]
          %v516 = vld [vmem:[#allocation2 + $0x8] sm:$0xff]
          %v517 = vld [vmem:[#allocation2 + $0x10] sm:$0xff]
          %v518 = vld [vmem:[#allocation2 + $0x18] sm:$0xff]
          %v519 = vld [vmem:[#allocation2 + $0x20] sm:$0xff]
          %v520 = vld [vmem:[#allocation2 + $0x28] sm:$0xff]
          %v521 = vld [vmem:[#allocation2 + $0x30] sm:$0xff]
          %v522 = vmax.f32 %v501, %v502
          %523 = vmax.xlane.f32.xlu0 %v522
          %v524 = vpop.xlane.xlu0 %523
          %v525 = vmax.f32 %v503, %v504
          %526 = vmax.xlane.f32.xlu0 %v525
          %v527 = vpop.xlane.xlu0 %526
          %v528 = vmax.f32 %v505, %v506
          %529 = vmax.xlane.f32.xlu0 %v528
          %v530 = vpop.xlane.xlu0 %529
          %v531 = vmax.f32 %v507, %v508
          %532 = vmax.xlane.f32.xlu0 %v531
          %v533 = vpop.xlane.xlu0 %532
          %v534 = vmax.f32 %v509, %v510
          %535 = vmax.xlane.f32.xlu0 %v534
          %v536 = vpop.xlane.xlu0 %535
          %v537 = vmax.f32 %v511, %v512
          %538 = vmax.xlane.f32.xlu0 %v537
          %v539 = vpop.xlane.xlu0 %538
          %v540 = vmax.f32 %v513, %v514
          %541 = vmax.xlane.f32.xlu0 %v540
          %v542 = vpop.xlane.xlu0 %541
          %v543 = vmax.f32 %v515, %v524
          %v544 = vmax.f32 %v516, %v527
          %v545 = vmax.f32 %v517, %v530
          %v546 = vmax.f32 %v518, %v533
          %v547 = vmax.f32 %v519, %v536
          %v548 = vmax.f32 %v520, %v539
          %v549 = vmax.f32 %v521, %v542
          %v550 = vld [vmem:[#allocation3] sm:$0xff]
          %v551 = vld [vmem:[#allocation3 + $0x8] sm:$0xff]
          %v552 = vld [vmem:[#allocation3 + $0x10] sm:$0xff]
          %v553 = vld [vmem:[#allocation3 + $0x18] sm:$0xff]
          %v554 = vld [vmem:[#allocation3 + $0x20] sm:$0xff]
          %v555 = vld [vmem:[#allocation3 + $0x28] sm:$0xff]
          %v556 = vld [vmem:[#allocation3 + $0x30] sm:$0xff]
          %v557 = vsub.f32 %v515, %v543
          %v558 = vsub.f32 %v516, %v544
          %v559 = vsub.f32 %v517, %v545
          %v560 = vsub.f32 %v518, %v546
          %v561 = vsub.f32 %v519, %v547
          %v562 = vsub.f32 %v520, %v548
          %v563 = vsub.f32 %v521, %v549
          %v564 = vmul.f32 %v557, 1.442695
          %v565 = vpow.pop %v564
          %v566 = vmul.f32 %v558, 1.442695
          %v567 = vpow.pop %v566
          %v568 = vmul.f32 %v559, 1.442695
          %v569 = vpow.pop %v568
          %v570 = vmul.f32 %v560, 1.442695
          %v571 = vpow.pop %v570
          %v572 = vmul.f32 %v561, 1.442695
          %v573 = vpow.pop %v572
          %v574 = vmul.f32 %v562, 1.442695
          %v575 = vpow.pop %v574
          %v576 = vmul.f32 %v563, 1.442695
          %v577 = vpow.pop %v576
          %v578 = vmul.f32 %v550, %v565
          %v579 = vmul.f32 %v551, %v567
          %v580 = vmul.f32 %v552, %v569
          %v581 = vmul.f32 %v553, %v571
          %v582 = vmul.f32 %v554, %v573
          %v583 = vmul.f32 %v555, %v575
          %v584 = vmul.f32 %v556, %v577
          %586 = vset.pattern.permute.xlu0 0
          %587 = vperm.xlu0 %586, %v543
          %v588 = vpop.permute.xlu0 %587
          %591 = vset.pattern.permute.xlu0 0
          %592 = vperm.xlu0 %591, %v544
          %v593 = vpop.permute.xlu0 %592
          %596 = vset.pattern.permute.xlu0 0
          %597 = vperm.xlu0 %596, %v545
          %v598 = vpop.permute.xlu0 %597
          %601 = vset.pattern.permute.xlu0 0
          %602 = vperm.xlu0 %601, %v546
          %v603 = vpop.permute.xlu0 %602
          %606 = vset.pattern.permute.xlu0 0
          %607 = vperm.xlu0 %606, %v547
          %v608 = vpop.permute.xlu0 %607
          %611 = vset.pattern.permute.xlu0 0
          %612 = vperm.xlu0 %611, %v548
          %v613 = vpop.permute.xlu0 %612
          %616 = vset.pattern.permute.xlu0 0
          %617 = vperm.xlu0 %616, %v549
          %v618 = vpop.permute.xlu0 %617
          %v620 = vsub.f32 %v501, %v588
          %v621 = vsub.f32 %v502, %v588
          %v622 = vsub.f32 %v503, %v593
          %v623 = vsub.f32 %v504, %v593
          %v624 = vsub.f32 %v505, %v598
          %v625 = vsub.f32 %v506, %v598
          %v626 = vsub.f32 %v507, %v603
          %v627 = vsub.f32 %v508, %v603
          %v628 = vsub.f32 %v509, %v608
          %v629 = vsub.f32 %v510, %v608
          %v630 = vsub.f32 %v511, %v613
          %v631 = vsub.f32 %v512, %v613
          %v632 = vsub.f32 %v513, %v618
          %v633 = vsub.f32 %v514, %v618
          %v634 = vmul.f32 %v620, 1.442695
          %v635 = vpow.pop %v634
          %v636 = vmul.f32 %v621, 1.442695
          %v637 = vpow.pop %v636
          %v638 = vmul.f32 %v622, 1.442695
          %v639 = vpow.pop %v638
          %v640 = vmul.f32 %v623, 1.442695
          %v641 = vpow.pop %v640
          %v642 = vmul.f32 %v624, 1.442695
          %v643 = vpow.pop %v642
          %v644 = vmul.f32 %v625, 1.442695
          %v645 = vpow.pop %v644
          %v646 = vmul.f32 %v626, 1.442695
          %v647 = vpow.pop %v646
          %v648 = vmul.f32 %v627, 1.442695
          %v649 = vpow.pop %v648
          %v650 = vmul.f32 %v628, 1.442695
          %v651 = vpow.pop %v650
          %v652 = vmul.f32 %v629, 1.442695
          %v653 = vpow.pop %v652
          %v654 = vmul.f32 %v630, 1.442695
          %v655 = vpow.pop %v654
          %v656 = vmul.f32 %v631, 1.442695
          %v657 = vpow.pop %v656
          %v658 = vmul.f32 %v632, 1.442695
          %v659 = vpow.pop %v658
          %v660 = vmul.f32 %v633, 1.442695
          %v661 = vpow.pop %v660
          %v662 = vadd.f32 %v635, %v637
          %663 = vadd.xlane.f32.xlu0 %v662
          %v664 = vpop.xlane.xlu0 %663
          %v665 = vadd.f32 %v639, %v641
          %666 = vadd.xlane.f32.xlu0 %v665
          %v667 = vpop.xlane.xlu0 %666
          %v668 = vadd.f32 %v643, %v645
          %669 = vadd.xlane.f32.xlu0 %v668
          %v670 = vpop.xlane.xlu0 %669
          %v671 = vadd.f32 %v647, %v649
          %672 = vadd.xlane.f32.xlu0 %v671
          %v673 = vpop.xlane.xlu0 %672
          %v674 = vadd.f32 %v651, %v653
          %675 = vadd.xlane.f32.xlu0 %v674
          %v676 = vpop.xlane.xlu0 %675
          %v677 = vadd.f32 %v655, %v657
          %678 = vadd.xlane.f32.xlu0 %v677
          %v679 = vpop.xlane.xlu0 %678
          %v680 = vadd.f32 %v659, %v661
          %681 = vadd.xlane.f32.xlu0 %v680
          %v682 = vpop.xlane.xlu0 %681
          %v683 = vadd.f32 %v578, %v664
          %v684 = vadd.f32 %v579, %v667
          %v685 = vadd.f32 %v580, %v670
          %v686 = vadd.f32 %v581, %v673
          %v687 = vadd.f32 %v582, %v676
          %v688 = vadd.f32 %v583, %v679
          %v689 = vadd.f32 %v584, %v682
          %vm690 = vcmask 7168
          %691 = vst.msk [vmem:[#allocation3] sm:$0xff] %vm690, %v683
          %692 = vst.msk [vmem:[#allocation3 + $0x8] sm:$0xff] %vm690, %v684
          %693 = vst.msk [vmem:[#allocation3 + $0x10] sm:$0xff] %vm690, %v685
          %694 = vst.msk [vmem:[#allocation3 + $0x18] sm:$0xff] %vm690, %v686
          %695 = vst.msk [vmem:[#allocation3 + $0x20] sm:$0xff] %vm690, %v687
          %696 = vst.msk [vmem:[#allocation3 + $0x28] sm:$0xff] %vm690, %v688
          %697 = vst.msk [vmem:[#allocation3 + $0x30] sm:$0xff] %vm690, %v689
          %698 = vst.msk [vmem:[#allocation2] sm:$0xff] %vm690, %v543
          %699 = vst.msk [vmem:[#allocation2 + $0x8] sm:$0xff] %vm690, %v544
          %700 = vst.msk [vmem:[#allocation2 + $0x10] sm:$0xff] %vm690, %v545
          %701 = vst.msk [vmem:[#allocation2 + $0x18] sm:$0xff] %vm690, %v546
          %702 = vst.msk [vmem:[#allocation2 + $0x20] sm:$0xff] %vm690, %v547
          %703 = vst.msk [vmem:[#allocation2 + $0x28] sm:$0xff] %vm690, %v548
          %704 = vst.msk [vmem:[#allocation2 + $0x30] sm:$0xff] %vm690, %v549
        $region74: #{skipgram_forward.1} parent=61 // pred_fallthru
          _
        %p705 = scmp.eq.s32.totalorder %s23, 3
        %p706 = pnand %p287, %p705
        %p707 = pneg %p706
        // Predicated region
        $region75: #{skipgram_forward.1} parent=61 // pred_check
          _
        $region76: #{skipgram_forward.1} parent=61 // pred_check_branch
          %709 = sbr.rel (%p706) target = $region78
        $region77: #{skipgram_forward.1} parent=61 // pred_region
          %v710 = vld [vmem:[#allocation2] sm:$0xff]
          %v711 = vld [vmem:[#allocation2 + $0x8] sm:$0xff]
          %v712 = vld [vmem:[#allocation2 + $0x10] sm:$0xff]
          %v713 = vld [vmem:[#allocation2 + $0x18] sm:$0xff]
          %v714 = vld [vmem:[#allocation2 + $0x20] sm:$0xff]
          %v715 = vld [vmem:[#allocation2 + $0x28] sm:$0xff]
          %v716 = vld [vmem:[#allocation2 + $0x30] sm:$0xff]
          %v717 = vld [vmem:[#allocation3] sm:$0xff]
          %v718 = vld [vmem:[#allocation3 + $0x8] sm:$0xff]
          %v719 = vld [vmem:[#allocation3 + $0x10] sm:$0xff]
          %v720 = vld [vmem:[#allocation3 + $0x18] sm:$0xff]
          %v721 = vld [vmem:[#allocation3 + $0x20] sm:$0xff]
          %v722 = vld [vmem:[#allocation3 + $0x28] sm:$0xff]
          %v723 = vld [vmem:[#allocation3 + $0x30] sm:$0xff]
          %v724 = vlog2.pop %v717
          %v725 = vmul.f32 %v724, 0.6931472
          %v726 = vlog2.pop %v718
          %v727 = vmul.f32 %v726, 0.6931472
          %v728 = vlog2.pop %v719
          %v729 = vmul.f32 %v728, 0.6931472
          %v730 = vlog2.pop %v720
          %v731 = vmul.f32 %v730, 0.6931472
          %v732 = vlog2.pop %v721
          %v733 = vmul.f32 %v732, 0.6931472
          %v734 = vlog2.pop %v722
          %v735 = vmul.f32 %v734, 0.6931472
          %v736 = vlog2.pop %v723
          %v737 = vmul.f32 %v736, 0.6931472
          %v738 = vadd.f32 %v710, %v725
          %v739 = vadd.f32 %v711, %v727
          %v740 = vadd.f32 %v712, %v729
          %v741 = vadd.f32 %v713, %v731
          %v742 = vadd.f32 %v714, %v733
          %v743 = vadd.f32 %v715, %v735
          %v744 = vadd.f32 %v716, %v737
          %vm745 = vcmask 7168
          %746 = vst.msk [vmem:[#allocation2] sm:$0xff] %vm745, %v738
          %747 = vst.msk [vmem:[#allocation2 + $0x8] sm:$0xff] %vm745, %v739
          %748 = vst.msk [vmem:[#allocation2 + $0x10] sm:$0xff] %vm745, %v740
          %749 = vst.msk [vmem:[#allocation2 + $0x18] sm:$0xff] %vm745, %v741
          %750 = vst.msk [vmem:[#allocation2 + $0x20] sm:$0xff] %vm745, %v742
          %751 = vst.msk [vmem:[#allocation2 + $0x28] sm:$0xff] %vm745, %v743
          %752 = vst.msk [vmem:[#allocation2 + $0x30] sm:$0xff] %vm745, %v744
        $region78: #{skipgram_forward.1} parent=61 // pred_fallthru
          _
        %p753 = scmp.eq.s32.totalorder %s22, 1
        // Predicated region
        $region79: #{skipgram_forward.1} parent=61 // pred_check
          %p754 = pneg %p753
        $region80: #{skipgram_forward.1} parent=61 // pred_check_branch
          %756 = sbr.rel (%p754) target = $region82
        $region81: #{skipgram_forward.1} parent=61 // pred_region
          %v757 = vld [vmem:[#allocation2] sm:$0xff]
          %v758 = vld [vmem:[#allocation2 + $0x8] sm:$0xff]
          %v759 = vld [vmem:[#allocation2 + $0x10] sm:$0xff]
          %v760 = vld [vmem:[#allocation2 + $0x18] sm:$0xff]
          %v761 = vld [vmem:[#allocation2 + $0x20] sm:$0xff]
          %v762 = vld [vmem:[#allocation2 + $0x28] sm:$0xff]
          %v763 = vld [vmem:[#allocation2 + $0x30] sm:$0xff]
          %765 = vset.pattern.permute.xlu0 0
          %766 = vperm.xlu0 %765, %v757
          %v767 = vpop.permute.xlu0 %766
          %770 = vset.pattern.permute.xlu0 0
          %771 = vperm.xlu0 %770, %v758
          %v772 = vpop.permute.xlu0 %771
          %775 = vset.pattern.permute.xlu0 0
          %776 = vperm.xlu0 %775, %v759
          %v777 = vpop.permute.xlu0 %776
          %780 = vset.pattern.permute.xlu0 0
          %781 = vperm.xlu0 %780, %v760
          %v782 = vpop.permute.xlu0 %781
          %785 = vset.pattern.permute.xlu0 0
          %786 = vperm.xlu0 %785, %v761
          %v787 = vpop.permute.xlu0 %786
          %790 = vset.pattern.permute.xlu0 0
          %791 = vperm.xlu0 %790, %v762
          %v792 = vpop.permute.xlu0 %791
          %795 = vset.pattern.permute.xlu0 0
          %796 = vperm.xlu0 %795, %v763
          %v797 = vpop.permute.xlu0 %796
          %v799 = vsub.f32 %v443, %v767
          %v800 = vsub.f32 %v471, %v767
          %v801 = vsub.f32 %v445, %v772
          %v802 = vsub.f32 %v473, %v772
          %v803 = vsub.f32 %v448, %v777
          %v804 = vsub.f32 %v476, %v777
          %v805 = vsub.f32 %v450, %v782
          %v806 = vsub.f32 %v478, %v782
          %v807 = vsub.f32 %v453, %v787
          %v808 = vsub.f32 %v481, %v787
          %v809 = vsub.f32 %v455, %v792
          %v810 = vsub.f32 %v483, %v792
          %v811 = vsub.f32 %v458, %v797
          %v812 = vsub.f32 %v486, %v797
          %813 = vst [vmem:[%s276] sm:$0xff] %v799
          %814 = vst [vmem:[%s276 + $0x8] sm:$0xff] %v800
          %815 = vst [vmem:[%s276 + $0x10] sm:$0xff] %v801
          %816 = vst [vmem:[%s276 + $0x18] sm:$0xff] %v802
          %817 = vst [vmem:[%s276 + $0x20] sm:$0xff] %v803
          %818 = vst [vmem:[%s276 + $0x28] sm:$0xff] %v804
          %819 = vst [vmem:[%s276 + $0x30] sm:$0xff] %v805
          %820 = vst [vmem:[%s276 + $0x38] sm:$0xff] %v806
          %821 = vst [vmem:[%s276 + $0x40] sm:$0xff] %v807
          %822 = vst [vmem:[%s276 + $0x48] sm:$0xff] %v808
          %823 = vst [vmem:[%s276 + $0x50] sm:$0xff] %v809
          %824 = vst [vmem:[%s276 + $0x58] sm:$0xff] %v810
          %825 = vst [vmem:[%s276 + $0x60] sm:$0xff] %v811
          %826 = vst [vmem:[%s276 + $0x68] sm:$0xff] %v812
        $region82: #{skipgram_forward.1} parent=61 // pred_fallthru
          _
        %s827 = sand.u32 %s99, 1
        %s828 = scalar_lea.sflag [#allocation6], %s827
        %s829 = sand.u32 %s99, 1
        %s830 = smul.addr %s829, 112
        %s831 = scalar_lea.vmem [#allocation5], %s830
        // Predicated region
        $region83: #{skipgram_forward.1} parent=61 // pred_check
          %p832 = pneg %p109
        $region84: #{skipgram_forward.1} parent=61 // pred_check_branch
          %834 = sbr.rel (%p832) target = $region86
        $region85: #{skipgram_forward.1} parent=61 // pred_region
          %s835 = smul.u32 %s22, %s23
          %s836 = smul.u32 7, %s21
          %s837 = smul.u32 2, %s835
          %839 = vsyncadd %s828, 0
          %s840 = smul.addr %s836, 8
          %s841 = sadd.s32 %s837, %s840
          %s842 = smul.addr %s841, 8
          %s843 = scalar_lea.hbm %s2, %s842
          %s844 = sshll.u32 %s831, 4
          %s845 = int_to_ptr.vmem [resolvable:$true] %s844
          %s846 = sshll.u32 %s843, 4
          %s847 = int_to_ptr.hbm [resolvable:$true] %s846
          %852 = dma.vmem_to_hbm [thread:$0]  %s845, 1792, %s847, %s828, 256, 1024, 16
        $region86: #{skipgram_forward.1} parent=61 // pred_fallthru
          _
      $region62: #{skipgram_forward.1} parent=5 // pred_fallthru
        _
      %p853 = scmp.le.s32.totalorder 2, %s11
      // Predicated region
      $region87: #{skipgram_forward.1} parent=5 // pred_check
        %p854 = pneg %p853
      $region88: #{skipgram_forward.1} parent=5 // pred_check_branch
        %856 = sbr.rel (%p854) target = $region90
      $region89: #{skipgram_forward.1} parent=5 // pred_region
        %s857 = ssub.s32 %s11, 2
        // Predicated region
        $region91: #{skipgram_forward.1} parent=89 // pred_check
          %p858 = pneg %p115
        $region92: #{skipgram_forward.1} parent=89 // pred_check_branch
          %860 = sbr.rel (%p858) target = $region94
        $region93: #{skipgram_forward.1} parent=89 // pred_region
          %s861 = sand.u32 %s100, 1
          %s862 = scalar_lea.sflag [#allocation6], %s861
          %s863 = sand.u32 %s100, 1
          %s864 = smul.addr %s863, 112
          %s865 = scalar_lea.vmem [#allocation5], %s864
          %867 = dma.done %s862, 1792
        $region94: #{skipgram_forward.1} parent=89 // pred_fallthru
          _
      $region90: #{skipgram_forward.1} parent=5 // pred_fallthru
        _
    $region6: #{skipgram_forward.1} parent=1 // loop_footer
      %s15 = sadd.s32 1, %s11
    $region7: #{skipgram_forward.1} parent=1 // loop_footer_branch
      %10 = sbr.rel target = $region3
    $region8: #{skipgram_forward.1} parent=1 // loop_exit
      _
    %868 = vsyncpa [#allocation6], 1
    %s869 = scalar_lea.sflag [#allocation6], 1
    %870 = vsyncpa %s869, 1

</llo_original>
